<compile_context>
chip_gen: v7x
topology: tpu7x:2x2x1
jax: 0.10.0
libtpu: 0.0.40
codegen_flags: <defaults>
</compile_context>

<pallas_src>
import jax
import jax.numpy as jnp
import numpy as np
from jax.experimental import pallas as pl
from jax.experimental.pallas import tpu as pltpu


# ---------------------------------------------------------------------------
# Fused kernel: text projection + mesh projection + L2 normalize + logits.
# ---------------------------------------------------------------------------
def clip_fused_kernel(scale_ref,   # SMEM (1,)            f32 : exp(logit_scale)
                      txt_ref,     # VMEM (BT_PAD, Dt)    bf16: gathered SEP rows
                      wt_ref,      # VMEM (Dt, E)         bf16: text_linear weight
                      bt_ref,      # VMEM (1, E)          f32 : text_linear bias
                      mesh_ref,    # VMEM (Bm, Dm)        bf16: mesh input
                      wm_ref,      # VMEM (Dm, E)         bf16: mesh_encoder weight
                      bm_ref,      # VMEM (1, E)          f32 : mesh_encoder bias
                      li_ref):     # VMEM (Bm, BT_PAD)    f32 : scaled logits
    # text_linear on the gathered SEP-token hidden states (bf16 MXU, f32 acc)
    txt_feat = jnp.dot(txt_ref[...], wt_ref[...],
                       preferred_element_type=jnp.float32) + bt_ref[...]
    # floor guards the zero-padded rows (sliced off in the wrapper anyway)
    txt_ss = jnp.maximum(jnp.sum(txt_feat * txt_feat, axis=-1, keepdims=True),
                         1e-30)
    txt_n = txt_feat * jax.lax.rsqrt(txt_ss)

    # mesh_encoder (linear) + normalize
    mesh_feat = jnp.dot(mesh_ref[...], wm_ref[...],
                        preferred_element_type=jnp.float32) + bm_ref[...]
    mesh_ss = jnp.maximum(jnp.sum(mesh_feat * mesh_feat, axis=-1, keepdims=True),
                          1e-30)
    mesh_n = mesh_feat * jax.lax.rsqrt(mesh_ss)

    # logits_per_image = scale * mesh_n @ txt_n.T  (contract last dims; no
    # second matmul for logits_per_text -- that is a wrapper transpose).
    li_ref[...] = scale_ref[0] * jax.lax.dot_general(
        mesh_n, txt_n, (((1,), (1,)), ((), ())),
        preferred_element_type=jnp.float32)


# ---------------------------------------------------------------------------
# Wrapper
# ---------------------------------------------------------------------------
def clip_forward(mesh, text_hidden, sep_pos, w_mesh, b_mesh, w_text, b_text,
                 logit_scale):
    Bm, Dm = mesh.shape
    Bt, L, Dt = text_hidden.shape
    E = w_text.shape[1]

    # True gather of the SEP-token row per example (first occurrence).
    gathered = jnp.take_along_axis(
        text_hidden, sep_pos.astype(jnp.int32)[:, None, None], axis=1)[:, 0, :]

    # Pad the text batch to a lane-dense multiple of 128 so the logits store is
    # an unmasked vst; padded columns are sliced off below.
    bt_pad = max(128, ((Bt + 127) // 128) * 128)
    gathered = jnp.pad(gathered, ((0, bt_pad - Bt), (0, 0)))

    # bf16 at the pallas_call boundary; f32 accumulation inside (MXU).
    txt_bf = gathered.astype(jnp.bfloat16)
    wt_bf = w_text.astype(jnp.bfloat16)
    mesh_bf = mesh.astype(jnp.bfloat16)
    wm_bf = w_mesh.astype(jnp.bfloat16)

    # exp(logit_scale) hoisted out of the kernel hot path.
    scale = jnp.exp(logit_scale).astype(jnp.float32).reshape(1)

    smem = pl.BlockSpec(memory_space=pltpu.MemorySpace.SMEM)
    vmem = lambda: pl.BlockSpec(memory_space=pltpu.MemorySpace.VMEM)

    li_pad = pl.pallas_call(
        clip_fused_kernel,
        out_shape=jax.ShapeDtypeStruct((Bm, bt_pad), jnp.float32),
        in_specs=[smem, vmem(), vmem(), vmem(), vmem(), vmem(), vmem()],
        out_specs=vmem(),
    )(scale, txt_bf, wt_bf, b_text, mesh_bf, wm_bf, b_mesh)

    logits_per_image = li_pad[:, :Bt]
    logits_per_text = logits_per_image.T          # torch: logits_per_image.t()
    return logits_per_image, logits_per_text


# ---------------------------------------------------------------------------
# Synthetic stand-in for bert(text).last_hidden_state  ->  (Bt, L, 768)
# ---------------------------------------------------------------------------
def synthetic_text_encoder(token_ids, tok_emb, pos_emb):
    return tok_emb[token_ids] + pos_emb[None, :, :]


# ---------------------------------------------------------------------------
# Pure numpy reference (same bf16-rounded inputs, f32 math)
# ---------------------------------------------------------------------------
def reference_forward(mesh, text_hidden, sep_pos, w_mesh, b_mesh, w_text,
                      b_text, logit_scale):
    mesh = np.asarray(mesh, np.float32)
    th = np.asarray(text_hidden, np.float32)
    sep = np.asarray(sep_pos, np.int64).reshape(-1)
    wm = np.asarray(w_mesh, np.float32)
    bm = np.asarray(b_mesh, np.float32)
    wt = np.asarray(w_text, np.float32)
    bt = np.asarray(b_text, np.float32)

    gathered = th[np.arange(th.shape[0]), sep]                  # (Bt, 768)
    txt_feat = gathered @ wt + bt
    mesh_feat = mesh @ wm + bm
    mesh_n = mesh_feat / np.linalg.norm(mesh_feat, axis=-1, keepdims=True)
    txt_n = txt_feat / np.linalg.norm(txt_feat, axis=-1, keepdims=True)
    scale = np.exp(np.asarray(logit_scale, np.float32)[0])
    li = scale * mesh_n @ txt_n.T
    return li, li.T


if __name__ == "__main__":
    # Small shapes consistent with the module's forward.
    B_MESH, B_TEXT = 8, 16
    D_MESH = 64            # mesh feature dim (mesh_encoder input)
    E = 128                # joint_embed_dim (lane-dense multiple of 128)
    D_TXT = 768            # BERT hidden size (text_linear input)
    L = 32                 # context_length
    VOCAB = 1000
    SEP_ID = 102

    key = jax.random.PRNGKey(0)
    ks = jax.random.split(key, 10)

    def bf16_round(x):
        # round once so the kernel's bf16 boundary cast is lossless and the
        # f32 numpy reference sees the same values
        return jnp.asarray(x, jnp.bfloat16).astype(jnp.float32)

    mesh = bf16_round(jax.random.normal(ks[0], (B_MESH, D_MESH), jnp.float32))

    # token ids in [200, VOCAB) so SEP_ID (=102) appears exactly once per row
    text = jax.random.randint(ks[1], (B_TEXT, L), 200, VOCAB)
    sep_positions = jax.random.randint(ks[2], (B_TEXT,), 1, L)
    text = text.at[jnp.arange(B_TEXT), sep_positions].set(SEP_ID)

    tok_emb = 0.02 * jax.random.normal(ks[3], (VOCAB, D_TXT), jnp.float32)
    pos_emb = 0.02 * jax.random.normal(ks[4], (L, D_TXT), jnp.float32)
    w_mesh = bf16_round(0.05 * jax.random.normal(ks[5], (D_MESH, E), jnp.float32))
    b_mesh = 0.01 * jax.random.normal(ks[6], (1, E), jnp.float32)
    w_text = bf16_round(0.05 * jax.random.normal(ks[7], (D_TXT, E), jnp.float32))
    b_text = 0.01 * jax.random.normal(ks[8], (1, E), jnp.float32)
    logit_scale = jnp.array([np.log(1.0 / 0.07)], jnp.float32)

    text_hidden = bf16_round(synthetic_text_encoder(text, tok_emb, pos_emb))
    # torch:  x[arange(B), (text == 102).nonzero()[:, 1]]  (first SEP per row)
    sep_pos = jnp.argmax(text == SEP_ID, axis=1).astype(jnp.int32)

    clip_forward_jit = jax.jit(clip_forward)
    logits_per_image, logits_per_text = clip_forward_jit(
        mesh, text_hidden, sep_pos, w_mesh, b_mesh, w_text, b_text, logit_scale)
    jax.block_until_ready((logits_per_image, logits_per_text))

    ref_li, ref_lt = reference_forward(
        mesh, text_hidden, sep_pos, w_mesh, b_mesh, w_text, b_text, logit_scale)

    assert logits_per_image.shape == (B_MESH, B_TEXT)
    assert logits_per_text.shape == (B_TEXT, B_MESH)
    assert np.allclose(np.asarray(logits_per_image), ref_li,
                       atol=2e-3, rtol=2e-3)
    assert np.allclose(np.asarray(logits_per_text), ref_lt,
                       atol=2e-3, rtol=2e-3)

    print("KERNEL_OK")
</pallas_src>

<mosaic_0001>
module attributes {stable_mosaic.version = 11 : i64} {
  func.func @clip_fused_kernel(%arg0: memref<1xf32, #tpu.memory_space<smem>>, %arg1: memref<128x768xbf16, #tpu.memory_space<vmem>>, %arg2: memref<768x128xbf16, #tpu.memory_space<vmem>>, %arg3: memref<1x128xf32, #tpu.memory_space<vmem>>, %arg4: memref<8x64xbf16, #tpu.memory_space<vmem>>, %arg5: memref<64x128xbf16, #tpu.memory_space<vmem>>, %arg6: memref<1x128xf32, #tpu.memory_space<vmem>>, %arg7: memref<8x128xf32, #tpu.memory_space<vmem>>) attributes {dimension_semantics = [], scalar_prefetch = 0 : i64, scratch_operands = 0 : i64, tpu.core_type = #tpu.core_type<tc>} {
    %c0 = arith.constant 0 : index
    %c0_0 = arith.constant 0 : index
    %0 = vector.load %arg1[%c0, %c0_0] : memref<128x768xbf16, #tpu.memory_space<vmem>>, vector<128x768xbf16>
    %c0_1 = arith.constant 0 : index
    %c0_2 = arith.constant 0 : index
    %1 = vector.load %arg2[%c0_1, %c0_2] : memref<768x128xbf16, #tpu.memory_space<vmem>>, vector<768x128xbf16>
    %cst = arith.constant dense<0.000000e+00> : vector<128x128xf32>
    %2 = tpu.matmul %0, %1, %cst {dimension_numbers = #tpu.dot_dimension_numbers<[1], [0], [0], [1], [0, 0, 1, 1], [], []>} : vector<128x768xbf16>, vector<768x128xbf16>, vector<128x128xf32> -> vector<128x128xf32>
    %c0_3 = arith.constant 0 : index
    %c0_4 = arith.constant 0 : index
    %3 = vector.load %arg3[%c0_3, %c0_4] : memref<1x128xf32, #tpu.memory_space<vmem>>, vector<1x128xf32>
    %4 = vector.broadcast %3 : vector<1x128xf32> to vector<128x128xf32>
    %5 = arith.addf %2, %4 : vector<128x128xf32>
    %6 = arith.mulf %5, %5 : vector<128x128xf32>
    %cst_5 = arith.constant dense<0.000000e+00> : vector<128xf32>
    %7 = vector.multi_reduction <add>, %6, %cst_5 [1] : vector<128x128xf32> to vector<128xf32>
    %8 = vector.shape_cast %7 : vector<128xf32> to vector<128x1xf32>
    %cst_6 = arith.constant 1.000000e-30 : f32
    %9 = vector.broadcast %cst_6 : f32 to vector<128x1xf32>
    %10 = arith.maximumf %8, %9 : vector<128x1xf32>
    %11 = math.rsqrt %10 : vector<128x1xf32>
    %12 = vector.broadcast %11 : vector<128x1xf32> to vector<128x128xf32>
    %13 = arith.mulf %5, %12 : vector<128x128xf32>
    %c0_7 = arith.constant 0 : index
    %c0_8 = arith.constant 0 : index
    %14 = vector.load %arg4[%c0_7, %c0_8] : memref<8x64xbf16, #tpu.memory_space<vmem>>, vector<8x64xbf16>
    %c0_9 = arith.constant 0 : index
    %c0_10 = arith.constant 0 : index
    %15 = vector.load %arg5[%c0_9, %c0_10] : memref<64x128xbf16, #tpu.memory_space<vmem>>, vector<64x128xbf16>
    %cst_11 = arith.constant dense<0.000000e+00> : vector<8x128xf32>
    %16 = tpu.matmul %14, %15, %cst_11 {dimension_numbers = #tpu.dot_dimension_numbers<[1], [0], [0], [1], [0, 0, 1, 1], [], []>} : vector<8x64xbf16>, vector<64x128xbf16>, vector<8x128xf32> -> vector<8x128xf32>
    %c0_12 = arith.constant 0 : index
    %c0_13 = arith.constant 0 : index
    %17 = vector.load %arg6[%c0_12, %c0_13] : memref<1x128xf32, #tpu.memory_space<vmem>>, vector<1x128xf32>
    %18 = vector.broadcast %17 : vector<1x128xf32> to vector<8x128xf32>
    %19 = arith.addf %16, %18 : vector<8x128xf32>
    %20 = arith.mulf %19, %19 : vector<8x128xf32>
    %cst_14 = arith.constant dense<0.000000e+00> : vector<8xf32>
    %21 = vector.multi_reduction <add>, %20, %cst_14 [1] : vector<8x128xf32> to vector<8xf32>
    %22 = vector.shape_cast %21 : vector<8xf32> to vector<8x1xf32>
    %cst_15 = arith.constant 1.000000e-30 : f32
    %23 = vector.broadcast %cst_15 : f32 to vector<8x1xf32>
    %24 = arith.maximumf %22, %23 : vector<8x1xf32>
    %25 = math.rsqrt %24 : vector<8x1xf32>
    %26 = vector.broadcast %25 : vector<8x1xf32> to vector<8x128xf32>
    %27 = arith.mulf %19, %26 : vector<8x128xf32>
    %c0_16 = arith.constant 0 : index
    %28 = memref.load %arg0[%c0_16] : memref<1xf32, #tpu.memory_space<smem>>
    %cst_17 = arith.constant dense<0.000000e+00> : vector<8x128xf32>
    %29 = tpu.matmul %27, %13, %cst_17 {dimension_numbers = #tpu.dot_dimension_numbers<[1], [1], [0], [0], [0, 0, 1, 0], [], []>} : vector<8x128xf32>, vector<128x128xf32>, vector<8x128xf32> -> vector<8x128xf32>
    %30 = vector.broadcast %28 : f32 to vector<8x128xf32>
    %31 = arith.mulf %30, %29 : vector<8x128xf32>
    %c0_18 = arith.constant 0 : index
    %c0_19 = arith.constant 0 : index
    %32 = vector.load %arg7[%c0_18, %c0_19] : memref<8x128xf32, #tpu.memory_space<vmem>>, vector<8x128xf32>
    tpu.vector_store %arg7[%c0_18, %c0_19], %31 {strides = array<i32>} : memref<8x128xf32, #tpu.memory_space<vmem>>, vector<8x128xf32>,
    return
  }
}

</mosaic_0001>

<llo_original>
// kernel: clip_forward.1
$region0: #{clip_forward.1}
  #allocation0 [shape = 'u32[]', space=smem, size = 0x4, offset = 0x4, fixed_abs, tag = 'smem constant byte address 0x4 - core index']
  #allocation1 [shape = 'u32[144,128]{1,0:T(1,128)}', space=vmem, size = 0x12000, scoped, tag = 'internal scratch']
  #allocation2 [shape = 'f32[1]{0:T(128)S(6)}', space=smem, size = 0x200, scoped, tag = 'scoped memory for clip_forward.1']
  %s0 = inlined_call_operand.<no memory space> [shape: f32[1], index: 0, kind: input, shape index: {}]
  %s1 = inlined_call_operand.vmem [shape: bf16[128,768], index: 1, kind: input, shape index: {}]
  %s2 = inlined_call_operand.vmem [shape: bf16[768,128], index: 2, kind: input, shape index: {}]
  %s3 = inlined_call_operand.hbm [shape: f32[1,128], index: 3, kind: input, shape index: {}]
  %s4 = inlined_call_operand.vmem [shape: bf16[8,64], index: 4, kind: input, shape index: {}]
  %s5 = inlined_call_operand.vmem [shape: bf16[64,128], index: 5, kind: input, shape index: {}]
  %s6 = inlined_call_operand.hbm [shape: f32[1,128], index: 6, kind: input, shape index: {}]
  %s7 = inlined_call_operand.vmem [shape: f32[8,128], index: 7, kind: output, shape index: {}]
  %s8 = sld [smem:[#allocation0]]
  $region46: #{clip_forward.1} parent=0
    _
  %s10 = ssub.s32 1, %s8
  %s11 = scalar_select 0, %s10, %s8
  %12 = sst [smem:[#allocation2]] %s0
  $region1: #{clip_forward.1} parent=0
    #allocation3 [shape = 'u8[512]{0}', space=vmem, size = 0x400, scoped, tag = 'input window, operand 3, single buffered']
    #allocation4 [shape = 's32[1]{0}', space=sflag, size = 0x4, scoped, tag = 'scoped memory for clip_forward.1']
    #allocation5 [shape = 'u8[512]{0}', space=vmem, size = 0x400, scoped, tag = 'input window, operand 6, single buffered']
    #allocation6 [shape = 's32[1]{0}', space=sflag, size = 0x4, scoped, tag = 'scoped memory for clip_forward.1']
    %13 = vsyncpa [#allocation4], 0
    %14 = vsyncpa [#allocation6], 0
    // Predicated region
    $region2: #{clip_forward.1} parent=1 // pred_check
      _
    $region3: #{clip_forward.1} parent=1 // pred_check_branch
      %16 = sbr.rel (0) target = $region5
    $region4: #{clip_forward.1} parent=1 // pred_region
      _
    $region5: #{clip_forward.1} parent=1 // pred_fallthru
      _
    // Predicated region
    $region6: #{clip_forward.1} parent=1 // pred_check
      _
    $region7: #{clip_forward.1} parent=1 // pred_check_branch
      %18 = sbr.rel (0) target = $region9
    $region8: #{clip_forward.1} parent=1 // pred_region
      _
    $region9: #{clip_forward.1} parent=1 // pred_fallthru
      _
    // Predicated region
    $region10: #{clip_forward.1} parent=1 // pred_check
      _
    $region11: #{clip_forward.1} parent=1 // pred_check_branch
      %20 = sbr.rel (0) target = $region13
    $region12: #{clip_forward.1} parent=1 // pred_region
      _
    $region13: #{clip_forward.1} parent=1 // pred_fallthru
      _
    // Predicated region
    $region14: #{clip_forward.1} parent=1 // pred_check
      _
    $region15: #{clip_forward.1} parent=1 // pred_check_branch
      %22 = sbr.rel (0) target = $region17
    $region16: #{clip_forward.1} parent=1 // pred_region
      %s24 = ssub.s32 16, 16
      %25 = vsyncadd [#allocation4], %s24
      %s27 = sshll.u32 [#allocation3], 4
      %s28 = int_to_ptr.vmem [resolvable:$true] %s27
      %30 = dma.hbm_to_vmem [thread:$0]  %s3, 16, %s28, [#allocation4]
    $region17: #{clip_forward.1} parent=1 // pred_fallthru
      _
    // Predicated region
    $region18: #{clip_forward.1} parent=1 // pred_check
      _
    $region19: #{clip_forward.1} parent=1 // pred_check_branch
      %32 = sbr.rel (0) target = $region21
    $region20: #{clip_forward.1} parent=1 // pred_region
      _
    $region21: #{clip_forward.1} parent=1 // pred_fallthru
      _
    // Predicated region
    $region22: #{clip_forward.1} parent=1 // pred_check
      _
    $region23: #{clip_forward.1} parent=1 // pred_check_branch
      %34 = sbr.rel (0) target = $region25
    $region24: #{clip_forward.1} parent=1 // pred_region
      _
    $region25: #{clip_forward.1} parent=1 // pred_fallthru
      _
    // Predicated region
    $region26: #{clip_forward.1} parent=1 // pred_check
      _
    $region27: #{clip_forward.1} parent=1 // pred_check_branch
      %36 = sbr.rel (0) target = $region29
    $region28: #{clip_forward.1} parent=1 // pred_region
      %s38 = ssub.s32 16, 16
      %39 = vsyncadd [#allocation6], %s38
      %s41 = sshll.u32 [#allocation5], 4
      %s42 = int_to_ptr.vmem [resolvable:$true] %s41
      %44 = dma.hbm_to_vmem [thread:$0]  %s6, 16, %s42, [#allocation6]
    $region29: #{clip_forward.1} parent=1 // pred_fallthru
      _
    // Predicated region
    $region30: #{clip_forward.1} parent=1 // pred_check
      _
    $region31: #{clip_forward.1} parent=1 // pred_check_branch
      %46 = sbr.rel (0) target = $region33
    $region32: #{clip_forward.1} parent=1 // pred_region
      %47 = dma.done [#allocation4], 16
    $region33: #{clip_forward.1} parent=1 // pred_fallthru
      _
    // Predicated region
    $region34: #{clip_forward.1} parent=1 // pred_check
      _
    $region35: #{clip_forward.1} parent=1 // pred_check_branch
      %49 = sbr.rel (0) target = $region37
    $region36: #{clip_forward.1} parent=1 // pred_region
      %50 = dma.done [#allocation6], 16
    $region37: #{clip_forward.1} parent=1 // pred_fallthru
      _
    %v52 = vld [vmem:[%s1] sm:$0xff]
    %v53 = vld [vmem:[%s1 + $0x8] sm:$0xff]
    %v54 = vld [vmem:[%s1 + $0x10] sm:$0xff]
    %v55 = vld [vmem:[%s1 + $0x18] sm:$0xff]
    %v56 = vld [vmem:[%s1 + $0x20] sm:$0xff]
    %v57 = vld [vmem:[%s1 + $0x28] sm:$0xff]
    %v58 = vld [vmem:[%s1 + $0x30] sm:$0xff]
    %v59 = vld [vmem:[%s1 + $0x38] sm:$0xff]
    %v60 = vld [vmem:[%s1 + $0x40] sm:$0xff]
    %v61 = vld [vmem:[%s1 + $0x48] sm:$0xff]
    %v62 = vld [vmem:[%s1 + $0x50] sm:$0xff]
    %v63 = vld [vmem:[%s1 + $0x58] sm:$0xff]
    %v64 = vld [vmem:[%s1 + $0x60] sm:$0xff]
    %v65 = vld [vmem:[%s1 + $0x68] sm:$0xff]
    %v66 = vld [vmem:[%s1 + $0x70] sm:$0xff]
    %v67 = vld [vmem:[%s1 + $0x78] sm:$0xff]
    %v68 = vld [vmem:[%s1 + $0x80] sm:$0xff]
    %v69 = vld [vmem:[%s1 + $0x88] sm:$0xff]
    %v70 = vld [vmem:[%s1 + $0x90] sm:$0xff]
    %v71 = vld [vmem:[%s1 + $0x98] sm:$0xff]
    %v72 = vld [vmem:[%s1 + $0xa0] sm:$0xff]
    %v73 = vld [vmem:[%s1 + $0xa8] sm:$0xff]
    %v74 = vld [vmem:[%s1 + $0xb0] sm:$0xff]
    %v75 = vld [vmem:[%s1 + $0xb8] sm:$0xff]
    %v76 = vld [vmem:[%s1 + $0xc0] sm:$0xff]
    %v77 = vld [vmem:[%s1 + $0xc8] sm:$0xff]
    %v78 = vld [vmem:[%s1 + $0xd0] sm:$0xff]
    %v79 = vld [vmem:[%s1 + $0xd8] sm:$0xff]
    %v80 = vld [vmem:[%s1 + $0xe0] sm:$0xff]
    %v81 = vld [vmem:[%s1 + $0xe8] sm:$0xff]
    %v82 = vld [vmem:[%s1 + $0xf0] sm:$0xff]
    %v83 = vld [vmem:[%s1 + $0xf8] sm:$0xff]
    %v84 = vld [vmem:[%s1 + $0x100] sm:$0xff]
    %v85 = vld [vmem:[%s1 + $0x108] sm:$0xff]
    %v86 = vld [vmem:[%s1 + $0x110] sm:$0xff]
    %v87 = vld [vmem:[%s1 + $0x118] sm:$0xff]
    %v88 = vld [vmem:[%s1 + $0x120] sm:$0xff]
    %v89 = vld [vmem:[%s1 + $0x128] sm:$0xff]
    %v90 = vld [vmem:[%s1 + $0x130] sm:$0xff]
    %v91 = vld [vmem:[%s1 + $0x138] sm:$0xff]
    %v92 = vld [vmem:[%s1 + $0x140] sm:$0xff]
    %v93 = vld [vmem:[%s1 + $0x148] sm:$0xff]
    %v94 = vld [vmem:[%s1 + $0x150] sm:$0xff]
    %v95 = vld [vmem:[%s1 + $0x158] sm:$0xff]
    %v96 = vld [vmem:[%s1 + $0x160] sm:$0xff]
    %v97 = vld [vmem:[%s1 + $0x168] sm:$0xff]
    %v98 = vld [vmem:[%s1 + $0x170] sm:$0xff]
    %v99 = vld [vmem:[%s1 + $0x178] sm:$0xff]
    %v100 = vld [vmem:[%s2] sm:$0xf]
    %v101 = vld [vmem:[%s2 + $0x4] sm:$0xf]
    %v102 = vld [vmem:[%s2 + $0x8] sm:$0xf]
    %v103 = vld [vmem:[%s2 + $0xc] sm:$0xf]
    %v104 = vld [vmem:[%s2 + $0x10] sm:$0xf]
    %v105 = vld [vmem:[%s2 + $0x14] sm:$0xf]
    %v106 = vld [vmem:[%s2 + $0x18] sm:$0xf]
    %v107 = vld [vmem:[%s2 + $0x1c] sm:$0xf]
    %v108 = vld [vmem:[%s2 + $0x20] sm:$0xf]
    %v109 = vld [vmem:[%s2 + $0x24] sm:$0xf]
    %v110 = vld [vmem:[%s2 + $0x28] sm:$0xf]
    %v111 = vld [vmem:[%s2 + $0x2c] sm:$0xf]
    %v112 = vld [vmem:[%s2 + $0x30] sm:$0xf]
    %v113 = vld [vmem:[%s2 + $0x34] sm:$0xf]
    %v114 = vld [vmem:[%s2 + $0x38] sm:$0xf]
    %v115 = vld [vmem:[%s2 + $0x3c] sm:$0xf]
    %v116 = vld [vmem:[%s2 + $0x40] sm:$0xf]
    %v117 = vld [vmem:[%s2 + $0x44] sm:$0xf]
    %v118 = vld [vmem:[%s2 + $0x48] sm:$0xf]
    %v119 = vld [vmem:[%s2 + $0x4c] sm:$0xf]
    %v120 = vld [vmem:[%s2 + $0x50] sm:$0xf]
    %v121 = vld [vmem:[%s2 + $0x54] sm:$0xf]
    %v122 = vld [vmem:[%s2 + $0x58] sm:$0xf]
    %v123 = vld [vmem:[%s2 + $0x5c] sm:$0xf]
    %v124 = vld [vmem:[%s2 + $0x60] sm:$0xf]
    %v125 = vld [vmem:[%s2 + $0x64] sm:$0xf]
    %v126 = vld [vmem:[%s2 + $0x68] sm:$0xf]
    %v127 = vld [vmem:[%s2 + $0x6c] sm:$0xf]
    %v128 = vld [vmem:[%s2 + $0x70] sm:$0xf]
    %v129 = vld [vmem:[%s2 + $0x74] sm:$0xf]
    %v130 = vld [vmem:[%s2 + $0x78] sm:$0xf]
    %v131 = vld [vmem:[%s2 + $0x7c] sm:$0xf]
    %v132 = vld [vmem:[%s2 + $0x80] sm:$0xf]
    %v133 = vld [vmem:[%s2 + $0x84] sm:$0xf]
    %v134 = vld [vmem:[%s2 + $0x88] sm:$0xf]
    %v135 = vld [vmem:[%s2 + $0x8c] sm:$0xf]
    %v136 = vld [vmem:[%s2 + $0x90] sm:$0xf]
    %v137 = vld [vmem:[%s2 + $0x94] sm:$0xf]
    %v138 = vld [vmem:[%s2 + $0x98] sm:$0xf]
    %v139 = vld [vmem:[%s2 + $0x9c] sm:$0xf]
    %v140 = vld [vmem:[%s2 + $0xa0] sm:$0xf]
    %v141 = vld [vmem:[%s2 + $0xa4] sm:$0xf]
    %v142 = vld [vmem:[%s2 + $0xa8] sm:$0xf]
    %v143 = vld [vmem:[%s2 + $0xac] sm:$0xf]
    %v144 = vld [vmem:[%s2 + $0xb0] sm:$0xf]
    %v145 = vld [vmem:[%s2 + $0xb4] sm:$0xf]
    %v146 = vld [vmem:[%s2 + $0xb8] sm:$0xf]
    %v147 = vld [vmem:[%s2 + $0xbc] sm:$0xf]
    %v148 = vld [vmem:[%s2 + $0xc0] sm:$0xf]
    %v149 = vld [vmem:[%s2 + $0xc4] sm:$0xf]
    %v150 = vld [vmem:[%s2 + $0xc8] sm:$0xf]
    %v151 = vld [vmem:[%s2 + $0xcc] sm:$0xf]
    %v152 = vld [vmem:[%s2 + $0xd0] sm:$0xf]
    %v153 = vld [vmem:[%s2 + $0xd4] sm:$0xf]
    %v154 = vld [vmem:[%s2 + $0xd8] sm:$0xf]
    %v155 = vld [vmem:[%s2 + $0xdc] sm:$0xf]
    %v156 = vld [vmem:[%s2 + $0xe0] sm:$0xf]
    %v157 = vld [vmem:[%s2 + $0xe4] sm:$0xf]
    %v158 = vld [vmem:[%s2 + $0xe8] sm:$0xf]
    %v159 = vld [vmem:[%s2 + $0xec] sm:$0xf]
    %v160 = vld [vmem:[%s2 + $0xf0] sm:$0xf]
    %v161 = vld [vmem:[%s2 + $0xf4] sm:$0xf]
    %v162 = vld [vmem:[%s2 + $0xf8] sm:$0xf]
    %v163 = vld [vmem:[%s2 + $0xfc] sm:$0xf]
    %v164 = vld [vmem:[%s2 + $0x100] sm:$0xf]
    %v165 = vld [vmem:[%s2 + $0x104] sm:$0xf]
    %v166 = vld [vmem:[%s2 + $0x108] sm:$0xf]
    %v167 = vld [vmem:[%s2 + $0x10c] sm:$0xf]
    %v168 = vld [vmem:[%s2 + $0x110] sm:$0xf]
    %v169 = vld [vmem:[%s2 + $0x114] sm:$0xf]
    %v170 = vld [vmem:[%s2 + $0x118] sm:$0xf]
    %v171 = vld [vmem:[%s2 + $0x11c] sm:$0xf]
    %v172 = vld [vmem:[%s2 + $0x120] sm:$0xf]
    %v173 = vld [vmem:[%s2 + $0x124] sm:$0xf]
    %v174 = vld [vmem:[%s2 + $0x128] sm:$0xf]
    %v175 = vld [vmem:[%s2 + $0x12c] sm:$0xf]
    %v176 = vld [vmem:[%s2 + $0x130] sm:$0xf]
    %v177 = vld [vmem:[%s2 + $0x134] sm:$0xf]
    %v178 = vld [vmem:[%s2 + $0x138] sm:$0xf]
    %v179 = vld [vmem:[%s2 + $0x13c] sm:$0xf]
    %v180 = vld [vmem:[%s2 + $0x140] sm:$0xf]
    %v181 = vld [vmem:[%s2 + $0x144] sm:$0xf]
    %v182 = vld [vmem:[%s2 + $0x148] sm:$0xf]
    %v183 = vld [vmem:[%s2 + $0x14c] sm:$0xf]
    %v184 = vld [vmem:[%s2 + $0x150] sm:$0xf]
    %v185 = vld [vmem:[%s2 + $0x154] sm:$0xf]
    %v186 = vld [vmem:[%s2 + $0x158] sm:$0xf]
    %v187 = vld [vmem:[%s2 + $0x15c] sm:$0xf]
    %v188 = vld [vmem:[%s2 + $0x160] sm:$0xf]
    %v189 = vld [vmem:[%s2 + $0x164] sm:$0xf]
    %v190 = vld [vmem:[%s2 + $0x168] sm:$0xf]
    %v191 = vld [vmem:[%s2 + $0x16c] sm:$0xf]
    %v192 = vld [vmem:[%s2 + $0x170] sm:$0xf]
    %v193 = vld [vmem:[%s2 + $0x174] sm:$0xf]
    %v194 = vld [vmem:[%s2 + $0x178] sm:$0xf]
    %v195 = vld [vmem:[%s2 + $0x17c] sm:$0xf]
    %v196 = vld [vmem:[#allocation3] sm:$0x1]
    %v198 = vlaneseq
    %v199 = vshrl.u32 %v198, 7
    %v200 = vsub.s32 0, %v199
    %v201 = vrot.slane %v196, %v200
    %v251 = vunpack.c.l.b16 %v52
    %v252 = vunpack.c.h.b16 %v52
    %v253 = vunpack.c.l.b16 %v53
    %v254 = vunpack.c.h.b16 %v53
    %v255 = vunpack.c.l.b16 %v54
    %v256 = vunpack.c.h.b16 %v54
    %v257 = vunpack.c.l.b16 %v55
    %v258 = vunpack.c.h.b16 %v55
    %v259 = vunpack.c.l.b16 %v56
    %v260 = vunpack.c.h.b16 %v56
    %v261 = vunpack.c.l.b16 %v57
    %v262 = vunpack.c.h.b16 %v57
    %v263 = vunpack.c.l.b16 %v58
    %v264 = vunpack.c.h.b16 %v58
    %v265 = vunpack.c.l.b16 %v59
    %v266 = vunpack.c.h.b16 %v59
    %v267 = vunpack.c.l.b16 %v60
    %v268 = vunpack.c.h.b16 %v60
    %v269 = vunpack.c.l.b16 %v61
    %v270 = vunpack.c.h.b16 %v61
    %v271 = vunpack.c.l.b16 %v62
    %v272 = vunpack.c.h.b16 %v62
    %v273 = vunpack.c.l.b16 %v63
    %v274 = vunpack.c.h.b16 %v63
    %v275 = vunpack.c.l.b16 %v64
    %v276 = vunpack.c.h.b16 %v64
    %v277 = vunpack.c.l.b16 %v65
    %v278 = vunpack.c.h.b16 %v65
    %v279 = vunpack.c.l.b16 %v66
    %v280 = vunpack.c.h.b16 %v66
    %v281 = vunpack.c.l.b16 %v67
    %v282 = vunpack.c.h.b16 %v67
    %v283 = vunpack.c.l.b16 %v68
    %v284 = vunpack.c.h.b16 %v68
    %v285 = vunpack.c.l.b16 %v69
    %v286 = vunpack.c.h.b16 %v69
    %v287 = vunpack.c.l.b16 %v70
    %v288 = vunpack.c.h.b16 %v70
    %v289 = vunpack.c.l.b16 %v71
    %v290 = vunpack.c.h.b16 %v71
    %v291 = vunpack.c.l.b16 %v72
    %v292 = vunpack.c.h.b16 %v72
    %v293 = vunpack.c.l.b16 %v73
    %v294 = vunpack.c.h.b16 %v73
    %v295 = vunpack.c.l.b16 %v74
    %v296 = vunpack.c.h.b16 %v74
    %v297 = vunpack.c.l.b16 %v75
    %v298 = vunpack.c.h.b16 %v75
    %v299 = vunpack.c.l.b16 %v76
    %v300 = vunpack.c.h.b16 %v76
    %v301 = vunpack.c.l.b16 %v77
    %v302 = vunpack.c.h.b16 %v77
    %v303 = vunpack.c.l.b16 %v78
    %v304 = vunpack.c.h.b16 %v78
    %v305 = vunpack.c.l.b16 %v79
    %v306 = vunpack.c.h.b16 %v79
    %v307 = vunpack.c.l.b16 %v80
    %v308 = vunpack.c.h.b16 %v80
    %v309 = vunpack.c.l.b16 %v81
    %v310 = vunpack.c.h.b16 %v81
    %v311 = vunpack.c.l.b16 %v82
    %v312 = vunpack.c.h.b16 %v82
    %v313 = vunpack.c.l.b16 %v83
    %v314 = vunpack.c.h.b16 %v83
    %v315 = vunpack.c.l.b16 %v84
    %v316 = vunpack.c.h.b16 %v84
    %v317 = vunpack.c.l.b16 %v85
    %v318 = vunpack.c.h.b16 %v85
    %v319 = vunpack.c.l.b16 %v86
    %v320 = vunpack.c.h.b16 %v86
    %v321 = vunpack.c.l.b16 %v87
    %v322 = vunpack.c.h.b16 %v87
    %v323 = vunpack.c.l.b16 %v88
    %v324 = vunpack.c.h.b16 %v88
    %v325 = vunpack.c.l.b16 %v89
    %v326 = vunpack.c.h.b16 %v89
    %v327 = vunpack.c.l.b16 %v90
    %v328 = vunpack.c.h.b16 %v90
    %v329 = vunpack.c.l.b16 %v91
    %v330 = vunpack.c.h.b16 %v91
    %v331 = vunpack.c.l.b16 %v92
    %v332 = vunpack.c.h.b16 %v92
    %v333 = vunpack.c.l.b16 %v93
    %v334 = vunpack.c.h.b16 %v93
    %v335 = vunpack.c.l.b16 %v94
    %v336 = vunpack.c.h.b16 %v94
    %v337 = vunpack.c.l.b16 %v95
    %v338 = vunpack.c.h.b16 %v95
    %v339 = vunpack.c.l.b16 %v96
    %v340 = vunpack.c.h.b16 %v96
    %v341 = vunpack.c.l.b16 %v97
    %v342 = vunpack.c.h.b16 %v97
    %v343 = vunpack.c.l.b16 %v98
    %v344 = vunpack.c.h.b16 %v98
    %v345 = vunpack.c.l.b16 %v99
    %v346 = vunpack.c.h.b16 %v99
    %v347 = vpack.c.b16 %v257, %v251
    %v348 = vpack.c.b16 %v258, %v252
    %v349 = vpack.c.b16 %v259, %v253
    %v350 = vpack.c.b16 %v260, %v254
    %v351 = vpack.c.b16 %v261, %v255
    %v352 = vpack.c.b16 %v262, %v256
    %v353 = vpack.c.b16 %v269, %v263
    %v354 = vpack.c.b16 %v270, %v264
    %v355 = vpack.c.b16 %v271, %v265
    %v356 = vpack.c.b16 %v272, %v266
    %v357 = vpack.c.b16 %v273, %v267
    %v358 = vpack.c.b16 %v274, %v268
    %v359 = vpack.c.b16 %v281, %v275
    %v360 = vpack.c.b16 %v282, %v276
    %v361 = vpack.c.b16 %v283, %v277
    %v362 = vpack.c.b16 %v284, %v278
    %v363 = vpack.c.b16 %v285, %v279
    %v364 = vpack.c.b16 %v286, %v280
    %v365 = vpack.c.b16 %v293, %v287
    %v366 = vpack.c.b16 %v294, %v288
    %v367 = vpack.c.b16 %v295, %v289
    %v368 = vpack.c.b16 %v296, %v290
    %v369 = vpack.c.b16 %v297, %v291
    %v370 = vpack.c.b16 %v298, %v292
    %v371 = vpack.c.b16 %v305, %v299
    %v372 = vpack.c.b16 %v306, %v300
    %v373 = vpack.c.b16 %v307, %v301
    %v374 = vpack.c.b16 %v308, %v302
    %v375 = vpack.c.b16 %v309, %v303
    %v376 = vpack.c.b16 %v310, %v304
    %v377 = vpack.c.b16 %v317, %v311
    %v378 = vpack.c.b16 %v318, %v312
    %v379 = vpack.c.b16 %v319, %v313
    %v380 = vpack.c.b16 %v320, %v314
    %v381 = vpack.c.b16 %v321, %v315
    %v382 = vpack.c.b16 %v322, %v316
    %v383 = vpack.c.b16 %v329, %v323
    %v384 = vpack.c.b16 %v330, %v324
    %v385 = vpack.c.b16 %v331, %v325
    %v386 = vpack.c.b16 %v332, %v326
    %v387 = vpack.c.b16 %v333, %v327
    %v388 = vpack.c.b16 %v334, %v328
    %v389 = vpack.c.b16 %v341, %v335
    %v390 = vpack.c.b16 %v342, %v336
    %v391 = vpack.c.b16 %v343, %v337
    %v392 = vpack.c.b16 %v344, %v338
    %v393 = vpack.c.b16 %v345, %v339
    %v394 = vpack.c.b16 %v346, %v340
    %v539 = vunpack.c.l.b16 %v100
    %v540 = vunpack.c.l.b16 %v101
    %v541 = vunpack.c.l.b16 %v102
    %v542 = vunpack.c.l.b16 %v103
    %v543 = vunpack.c.l.b16 %v104
    %v544 = vunpack.c.l.b16 %v105
    %v545 = vunpack.c.l.b16 %v106
    %v546 = vunpack.c.l.b16 %v107
    %v547 = vunpack.c.l.b16 %v108
    %v548 = vunpack.c.l.b16 %v109
    %v549 = vunpack.c.l.b16 %v110
    %v550 = vunpack.c.l.b16 %v111
    %v551 = vunpack.c.l.b16 %v112
    %v552 = vunpack.c.l.b16 %v113
    %v553 = vunpack.c.l.b16 %v114
    %v554 = vunpack.c.l.b16 %v115
    %v555 = vunpack.c.l.b16 %v116
    %v556 = vunpack.c.l.b16 %v117
    %v557 = vunpack.c.l.b16 %v118
    %v558 = vunpack.c.l.b16 %v119
    %v559 = vunpack.c.l.b16 %v120
    %v560 = vunpack.c.l.b16 %v121
    %v561 = vunpack.c.l.b16 %v122
    %v562 = vunpack.c.l.b16 %v123
    %v563 = vunpack.c.l.b16 %v124
    %v564 = vunpack.c.l.b16 %v125
    %v565 = vunpack.c.l.b16 %v126
    %v566 = vunpack.c.l.b16 %v127
    %v567 = vunpack.c.l.b16 %v128
    %v568 = vunpack.c.l.b16 %v129
    %v569 = vunpack.c.l.b16 %v130
    %v570 = vunpack.c.l.b16 %v131
    %v571 = vunpack.c.l.b16 %v132
    %v572 = vunpack.c.l.b16 %v133
    %v573 = vunpack.c.l.b16 %v134
    %v574 = vunpack.c.l.b16 %v135
    %v575 = vunpack.c.l.b16 %v136
    %v576 = vunpack.c.l.b16 %v137
    %v577 = vunpack.c.l.b16 %v138
    %v578 = vunpack.c.l.b16 %v139
    %v579 = vunpack.c.l.b16 %v140
    %v580 = vunpack.c.l.b16 %v141
    %v581 = vunpack.c.l.b16 %v142
    %v582 = vunpack.c.l.b16 %v143
    %v583 = vunpack.c.l.b16 %v144
    %v584 = vunpack.c.l.b16 %v145
    %v585 = vunpack.c.l.b16 %v146
    %v586 = vunpack.c.l.b16 %v147
    %v587 = vunpack.c.l.b16 %v148
    %v588 = vunpack.c.l.b16 %v149
    %v589 = vunpack.c.l.b16 %v150
    %v590 = vunpack.c.l.b16 %v151
    %v591 = vunpack.c.l.b16 %v152
    %v592 = vunpack.c.l.b16 %v153
    %v593 = vunpack.c.l.b16 %v154
    %v594 = vunpack.c.l.b16 %v155
    %v595 = vunpack.c.l.b16 %v156
    %v596 = vunpack.c.l.b16 %v157
    %v597 = vunpack.c.l.b16 %v158
    %v598 = vunpack.c.l.b16 %v159
    %v599 = vunpack.c.l.b16 %v160
    %v600 = vunpack.c.l.b16 %v161
    %v601 = vunpack.c.l.b16 %v162
    %v602 = vunpack.c.l.b16 %v163
    %v603 = vunpack.c.l.b16 %v164
    %v604 = vunpack.c.l.b16 %v165
    %v605 = vunpack.c.l.b16 %v166
    %v606 = vunpack.c.l.b16 %v167
    %v607 = vunpack.c.l.b16 %v168
    %v608 = vunpack.c.l.b16 %v169
    %v609 = vunpack.c.l.b16 %v170
    %v610 = vunpack.c.l.b16 %v171
    %v611 = vunpack.c.l.b16 %v172
    %v612 = vunpack.c.l.b16 %v173
    %v613 = vunpack.c.l.b16 %v174
    %v614 = vunpack.c.l.b16 %v175
    %v615 = vunpack.c.l.b16 %v176
    %v616 = vunpack.c.l.b16 %v177
    %v617 = vunpack.c.l.b16 %v178
    %v618 = vunpack.c.l.b16 %v179
    %v619 = vunpack.c.l.b16 %v180
    %v620 = vunpack.c.l.b16 %v181
    %v621 = vunpack.c.l.b16 %v182
    %v622 = vunpack.c.l.b16 %v183
    %v623 = vunpack.c.l.b16 %v184
    %v624 = vunpack.c.l.b16 %v185
    %v625 = vunpack.c.l.b16 %v186
    %v626 = vunpack.c.l.b16 %v187
    %v627 = vunpack.c.l.b16 %v188
    %v628 = vunpack.c.l.b16 %v189
    %v629 = vunpack.c.l.b16 %v190
    %v630 = vunpack.c.l.b16 %v191
    %v631 = vunpack.c.l.b16 %v192
    %v632 = vunpack.c.l.b16 %v193
    %v633 = vunpack.c.l.b16 %v194
    %v634 = vunpack.c.l.b16 %v195
    %v635 = vpack.c.b16 %v540, %v539
    %v636 = vpack.c.b16 %v542, %v541
    %v637 = vpack.c.b16 %v544, %v543
    %v638 = vpack.c.b16 %v546, %v545
    %v639 = vpack.c.b16 %v548, %v547
    %v640 = vpack.c.b16 %v550, %v549
    %v641 = vpack.c.b16 %v552, %v551
    %v642 = vpack.c.b16 %v554, %v553
    %v643 = vpack.c.b16 %v556, %v555
    %v644 = vpack.c.b16 %v558, %v557
    %v645 = vpack.c.b16 %v560, %v559
    %v646 = vpack.c.b16 %v562, %v561
    %v647 = vpack.c.b16 %v564, %v563
    %v648 = vpack.c.b16 %v566, %v565
    %v649 = vpack.c.b16 %v568, %v567
    %v650 = vpack.c.b16 %v570, %v569
    %v651 = vpack.c.b16 %v572, %v571
    %v652 = vpack.c.b16 %v574, %v573
    %v653 = vpack.c.b16 %v576, %v575
    %v654 = vpack.c.b16 %v578, %v577
    %v655 = vpack.c.b16 %v580, %v579
    %v656 = vpack.c.b16 %v582, %v581
    %v657 = vpack.c.b16 %v584, %v583
    %v658 = vpack.c.b16 %v586, %v585
    %v659 = vpack.c.b16 %v588, %v587
    %v660 = vpack.c.b16 %v590, %v589
    %v661 = vpack.c.b16 %v592, %v591
    %v662 = vpack.c.b16 %v594, %v593
    %v663 = vpack.c.b16 %v596, %v595
    %v664 = vpack.c.b16 %v598, %v597
    %v665 = vpack.c.b16 %v600, %v599
    %v666 = vpack.c.b16 %v602, %v601
    %v667 = vpack.c.b16 %v604, %v603
    %v668 = vpack.c.b16 %v606, %v605
    %v669 = vpack.c.b16 %v608, %v607
    %v670 = vpack.c.b16 %v610, %v609
    %v671 = vpack.c.b16 %v612, %v611
    %v672 = vpack.c.b16 %v614, %v613
    %v673 = vpack.c.b16 %v616, %v615
    %v674 = vpack.c.b16 %v618, %v617
    %v675 = vpack.c.b16 %v620, %v619
    %v676 = vpack.c.b16 %v622, %v621
    %v677 = vpack.c.b16 %v624, %v623
    %v678 = vpack.c.b16 %v626, %v625
    %v679 = vpack.c.b16 %v628, %v627
    %v680 = vpack.c.b16 %v630, %v629
    %v681 = vpack.c.b16 %v632, %v631
    %v682 = vpack.c.b16 %v634, %v633
    %731 = vmatprep.subr.bf16.mxu0 0
    %732 = vmatpush1.bf16.msra.mxu0 %v635
    %733 = vmatprep.subr.bf16.mxu0 0
    %734 = vmatpush1.bf16.msra.mxu0 %v636
    %735 = vmatprep.subr.bf16.mxu0 0
    %736 = vmatpush1.bf16.msra.mxu0 %v637
    %737 = vmatprep.subr.bf16.mxu0 0
    %738 = vmatpush1.bf16.msra.mxu0 %v638
    %739 = vmatprep.subr.bf16.mxu0 0
    %740 = vmatpush1.bf16.msra.mxu0 %v639
    %741 = vmatprep.subr.bf16.mxu0 0
    %742 = vmatpush1.bf16.msra.mxu0 %v640
    %743 = vmatprep.subr.bf16.mxu0 0
    %744 = vmatpush1.bf16.msra.mxu0 %v641
    %745 = vmatprep.subr.bf16.mxu0 0
    %746 = vmatpush1.bf16.msra.mxu0 %v642
    %747 = vmatprep.subr.bf16.mxu0 0
    %748 = vmatpush1.bf16.msra.mxu0 %v643
    %749 = vmatprep.subr.bf16.mxu0 0
    %750 = vmatpush1.bf16.msra.mxu0 %v644
    %751 = vmatprep.subr.bf16.mxu0 0
    %752 = vmatpush1.bf16.msra.mxu0 %v645
    %753 = vmatprep.subr.bf16.mxu0 0
    %754 = vmatpush1.bf16.msra.mxu0 %v646
    %755 = vmatprep.subr.bf16.mxu0 0
    %756 = vmatpush1.bf16.msra.mxu0 %v647
    %757 = vmatprep.subr.bf16.mxu0 0
    %758 = vmatpush1.bf16.msra.mxu0 %v648
    %759 = vmatprep.subr.bf16.mxu0 0
    %760 = vmatpush1.bf16.msra.mxu0 %v649
    %761 = vmatprep.subr.bf16.mxu0 0
    %762 = vmatpush1.bf16.msra.mxu0 %v650
    %763 = vmatprep.mubr.bf16.mxu0 %v348
    %764 = vmatmul.mubr.bf16.gmra.mrb[0].mxu0 %v347
    %v765 = vpop.f32.mrb[0].mxu0
    %v766 = vadd.f32 %v201, %v765
    %v767 = vpop.f32.mrb[0].mxu0
    %v768 = vpop.f32.mrb[0].mxu0
    %v769 = vadd.f32 %v201, %v768
    %v770 = vpop.f32.mrb[0].mxu0
    %771 = vmatprep.mubr.bf16.mxu0 %v354
    %772 = vmatmul.mubr.bf16.gmra.mrb[0].mxu0 %v353
    %v773 = vpop.f32.mrb[0].mxu0
    %v774 = vadd.f32 %v201, %v773
    %v775 = vpop.f32.mrb[0].mxu0
    %v776 = vpop.f32.mrb[0].mxu0
    %v777 = vadd.f32 %v201, %v776
    %v778 = vpop.f32.mrb[0].mxu0
    %779 = vmatprep.mubr.bf16.mxu0 %v360
    %780 = vmatmul.mubr.bf16.gmra.mrb[0].mxu0 %v359
    %v781 = vpop.f32.mrb[0].mxu0
    %v782 = vadd.f32 %v201, %v781
    %v783 = vpop.f32.mrb[0].mxu0
    %v784 = vpop.f32.mrb[0].mxu0
    %v785 = vadd.f32 %v201, %v784
    %v786 = vpop.f32.mrb[0].mxu0
    %787 = vmatprep.mubr.bf16.mxu0 %v366
    %788 = vmatmul.mubr.bf16.gmra.mrb[0].mxu0 %v365
    %v789 = vpop.f32.mrb[0].mxu0
    %v790 = vadd.f32 %v201, %v789
    %v791 = vpop.f32.mrb[0].mxu0
    %v792 = vpop.f32.mrb[0].mxu0
    %v793 = vadd.f32 %v201, %v792
    %v794 = vpop.f32.mrb[0].mxu0
    %795 = vmatprep.mubr.bf16.mxu0 %v372
    %796 = vmatmul.mubr.bf16.gmra.mrb[0].mxu0 %v371
    %v797 = vpop.f32.mrb[0].mxu0
    %v798 = vadd.f32 %v201, %v797
    %v799 = vpop.f32.mrb[0].mxu0
    %v800 = vpop.f32.mrb[0].mxu0
    %v801 = vadd.f32 %v201, %v800
    %v802 = vpop.f32.mrb[0].mxu0
    %803 = vmatprep.mubr.bf16.mxu0 %v378
    %804 = vmatmul.mubr.bf16.gmra.mrb[0].mxu0 %v377
    %v805 = vpop.f32.mrb[0].mxu0
    %v806 = vadd.f32 %v201, %v805
    %v807 = vpop.f32.mrb[0].mxu0
    %v808 = vpop.f32.mrb[0].mxu0
    %v809 = vadd.f32 %v201, %v808
    %v810 = vpop.f32.mrb[0].mxu0
    %811 = vmatprep.mubr.bf16.mxu0 %v384
    %812 = vmatmul.mubr.bf16.gmra.mrb[0].mxu0 %v383
    %v813 = vpop.f32.mrb[0].mxu0
    %v814 = vadd.f32 %v201, %v813
    %v815 = vpop.f32.mrb[0].mxu0
    %v816 = vpop.f32.mrb[0].mxu0
    %v817 = vadd.f32 %v201, %v816
    %v818 = vpop.f32.mrb[0].mxu0
    %819 = vmatprep.mubr.bf16.mxu0 %v390
    %820 = vmatmul.mubr.bf16.gmra.mrb[0].mxu0 %v389
    %v821 = vpop.f32.mrb[0].mxu0
    %v822 = vadd.f32 %v201, %v821
    %v823 = vpop.f32.mrb[0].mxu0
    %v824 = vpop.f32.mrb[0].mxu0
    %v825 = vadd.f32 %v201, %v824
    %v826 = vpop.f32.mrb[0].mxu0
    %827 = vdwg.mxu0
    %828 = vmatprep.subr.bf16.mxu0 0
    %829 = vmatpush1.bf16.msra.mxu0 %v651
    %830 = vmatprep.subr.bf16.mxu0 0
    %831 = vmatpush1.bf16.msra.mxu0 %v652
    %832 = vmatprep.subr.bf16.mxu0 0
    %833 = vmatpush1.bf16.msra.mxu0 %v653
    %834 = vmatprep.subr.bf16.mxu0 0
    %835 = vmatpush1.bf16.msra.mxu0 %v654
    %836 = vmatprep.subr.bf16.mxu0 0
    %837 = vmatpush1.bf16.msra.mxu0 %v655
    %838 = vmatprep.subr.bf16.mxu0 0
    %839 = vmatpush1.bf16.msra.mxu0 %v656
    %840 = vmatprep.subr.bf16.mxu0 0
    %841 = vmatpush1.bf16.msra.mxu0 %v657
    %842 = vmatprep.subr.bf16.mxu0 0
    %843 = vmatpush1.bf16.msra.mxu0 %v658
    %844 = vmatprep.subr.bf16.mxu0 0
    %845 = vmatpush1.bf16.msra.mxu0 %v659
    %846 = vmatprep.subr.bf16.mxu0 0
    %847 = vmatpush1.bf16.msra.mxu0 %v660
    %848 = vmatprep.subr.bf16.mxu0 0
    %849 = vmatpush1.bf16.msra.mxu0 %v661
    %850 = vmatprep.subr.bf16.mxu0 0
    %851 = vmatpush1.bf16.msra.mxu0 %v662
    %852 = vmatprep.subr.bf16.mxu0 0
    %853 = vmatpush1.bf16.msra.mxu0 %v663
    %854 = vmatprep.subr.bf16.mxu0 0
    %855 = vmatpush1.bf16.msra.mxu0 %v664
    %856 = vmatprep.subr.bf16.mxu0 0
    %857 = vmatpush1.bf16.msra.mxu0 %v665
    %858 = vmatprep.subr.bf16.mxu0 0
    %859 = vmatpush1.bf16.msra.mxu0 %v666
    %860 = vmatprep.mubr.bf16.mxu0 %v350
    %861 = vmatmul.mubr.bf16.gmra.mrb[0].mxu0 %v349
    %v862 = vpop.f32.mrb[0].mxu0
    %v863 = vadd.f32 %v766, %v862
    %v864 = vpop.f32.mrb[0].mxu0
    %v865 = vpop.f32.mrb[0].mxu0
    %v866 = vadd.f32 %v769, %v865
    %v867 = vpop.f32.mrb[0].mxu0
    %868 = vmatprep.mubr.bf16.mxu0 %v356
    %869 = vmatmul.mubr.bf16.gmra.mrb[0].mxu0 %v355
    %v870 = vpop.f32.mrb[0].mxu0
    %v871 = vadd.f32 %v774, %v870
    %v872 = vpop.f32.mrb[0].mxu0
    %v873 = vpop.f32.mrb[0].mxu0
    %v874 = vadd.f32 %v777, %v873
    %v875 = vpop.f32.mrb[0].mxu0
    %876 = vmatprep.mubr.bf16.mxu0 %v362
    %877 = vmatmul.mubr.bf16.gmra.mrb[0].mxu0 %v361
    %v878 = vpop.f32.mrb[0].mxu0
    %v879 = vadd.f32 %v782, %v878
    %v880 = vpop.f32.mrb[0].mxu0
    %v881 = vpop.f32.mrb[0].mxu0
    %v882 = vadd.f32 %v785, %v881
    %v883 = vpop.f32.mrb[0].mxu0
    %884 = vmatprep.mubr.bf16.mxu0 %v368
    %885 = vmatmul.mubr.bf16.gmra.mrb[0].mxu0 %v367
    %v886 = vpop.f32.mrb[0].mxu0
    %v887 = vadd.f32 %v790, %v886
    %v888 = vpop.f32.mrb[0].mxu0
    %v889 = vpop.f32.mrb[0].mxu0
    %v890 = vadd.f32 %v793, %v889
    %v891 = vpop.f32.mrb[0].mxu0
    %892 = vmatprep.mubr.bf16.mxu0 %v374
    %893 = vmatmul.mubr.bf16.gmra.mrb[0].mxu0 %v373
    %v894 = vpop.f32.mrb[0].mxu0
    %v895 = vadd.f32 %v798, %v894
    %v896 = vpop.f32.mrb[0].mxu0
    %v897 = vpop.f32.mrb[0].mxu0
    %v898 = vadd.f32 %v801, %v897
    %v899 = vpop.f32.mrb[0].mxu0
    %900 = vmatprep.mubr.bf16.mxu0 %v380
    %901 = vmatmul.mubr.bf16.gmra.mrb[0].mxu0 %v379
    %v902 = vpop.f32.mrb[0].mxu0
    %v903 = vadd.f32 %v806, %v902
    %v904 = vpop.f32.mrb[0].mxu0
    %v905 = vpop.f32.mrb[0].mxu0
    %v906 = vadd.f32 %v809, %v905
    %v907 = vpop.f32.mrb[0].mxu0
    %908 = vmatprep.mubr.bf16.mxu0 %v386
    %909 = vmatmul.mubr.bf16.gmra.mrb[0].mxu0 %v385
    %v910 = vpop.f32.mrb[0].mxu0
    %v911 = vadd.f32 %v814, %v910
    %v912 = vpop.f32.mrb[0].mxu0
    %v913 = vpop.f32.mrb[0].mxu0
    %v914 = vadd.f32 %v817, %v913
    %v915 = vpop.f32.mrb[0].mxu0
    %916 = vmatprep.mubr.bf16.mxu0 %v392
    %917 = vmatmul.mubr.bf16.gmra.mrb[0].mxu0 %v391
    %v918 = vpop.f32.mrb[0].mxu0
    %v919 = vadd.f32 %v822, %v918
    %v920 = vpop.f32.mrb[0].mxu0
    %v921 = vpop.f32.mrb[0].mxu0
    %v922 = vadd.f32 %v825, %v921
    %v923 = vpop.f32.mrb[0].mxu0
    %924 = vdwg.mxu0
    %925 = vmatprep.subr.bf16.mxu0 0
    %926 = vmatpush1.bf16.msra.mxu0 %v667
    %927 = vmatprep.subr.bf16.mxu0 0
    %928 = vmatpush1.bf16.msra.mxu0 %v668
    %929 = vmatprep.subr.bf16.mxu0 0
    %930 = vmatpush1.bf16.msra.mxu0 %v669
    %931 = vmatprep.subr.bf16.mxu0 0
    %932 = vmatpush1.bf16.msra.mxu0 %v670
    %933 = vmatprep.subr.bf16.mxu0 0
    %934 = vmatpush1.bf16.msra.mxu0 %v671
    %935 = vmatprep.subr.bf16.mxu0 0
    %936 = vmatpush1.bf16.msra.mxu0 %v672
    %937 = vmatprep.subr.bf16.mxu0 0
    %938 = vmatpush1.bf16.msra.mxu0 %v673
    %939 = vmatprep.subr.bf16.mxu0 0
    %940 = vmatpush1.bf16.msra.mxu0 %v674
    %941 = vmatprep.subr.bf16.mxu0 0
    %942 = vmatpush1.bf16.msra.mxu0 %v675
    %943 = vmatprep.subr.bf16.mxu0 0
    %944 = vmatpush1.bf16.msra.mxu0 %v676
    %945 = vmatprep.subr.bf16.mxu0 0
    %946 = vmatpush1.bf16.msra.mxu0 %v677
    %947 = vmatprep.subr.bf16.mxu0 0
    %948 = vmatpush1.bf16.msra.mxu0 %v678
    %949 = vmatprep.subr.bf16.mxu0 0
    %950 = vmatpush1.bf16.msra.mxu0 %v679
    %951 = vmatprep.subr.bf16.mxu0 0
    %952 = vmatpush1.bf16.msra.mxu0 %v680
    %953 = vmatprep.subr.bf16.mxu0 0
    %954 = vmatpush1.bf16.msra.mxu0 %v681
    %955 = vmatprep.subr.bf16.mxu0 0
    %956 = vmatpush1.bf16.msra.mxu0 %v682
    %957 = vmatprep.mubr.bf16.mxu0 %v352
    %958 = vmatmul.mubr.bf16.gmra.mrb[0].mxu0 %v351
    %v959 = vpop.f32.mrb[0].mxu0
    %v960 = vadd.f32 %v863, %v959
    %v961 = vpop.f32.mrb[0].mxu0
    %v962 = vpop.f32.mrb[0].mxu0
    %v963 = vadd.f32 %v866, %v962
    %v964 = vpop.f32.mrb[0].mxu0
    %965 = vmatprep.mubr.bf16.mxu0 %v358
    %966 = vmatmul.mubr.bf16.gmra.mrb[0].mxu0 %v357
    %v967 = vpop.f32.mrb[0].mxu0
    %v968 = vadd.f32 %v871, %v967
    %v969 = vpop.f32.mrb[0].mxu0
    %v970 = vpop.f32.mrb[0].mxu0
    %v971 = vadd.f32 %v874, %v970
    %v972 = vpop.f32.mrb[0].mxu0
    %973 = vmatprep.mubr.bf16.mxu0 %v364
    %974 = vmatmul.mubr.bf16.gmra.mrb[0].mxu0 %v363
    %v975 = vpop.f32.mrb[0].mxu0
    %v976 = vadd.f32 %v879, %v975
    %v977 = vpop.f32.mrb[0].mxu0
    %v978 = vpop.f32.mrb[0].mxu0
    %v979 = vadd.f32 %v882, %v978
    %v980 = vpop.f32.mrb[0].mxu0
    %981 = vmatprep.mubr.bf16.mxu0 %v370
    %982 = vmatmul.mubr.bf16.gmra.mrb[0].mxu0 %v369
    %v983 = vpop.f32.mrb[0].mxu0
    %v984 = vadd.f32 %v887, %v983
    %v985 = vpop.f32.mrb[0].mxu0
    %v986 = vpop.f32.mrb[0].mxu0
    %v987 = vadd.f32 %v890, %v986
    %v988 = vpop.f32.mrb[0].mxu0
    %989 = vmatprep.mubr.bf16.mxu0 %v376
    %990 = vmatmul.mubr.bf16.gmra.mrb[0].mxu0 %v375
    %v991 = vpop.f32.mrb[0].mxu0
    %v992 = vadd.f32 %v895, %v991
    %v993 = vpop.f32.mrb[0].mxu0
    %v994 = vpop.f32.mrb[0].mxu0
    %v995 = vadd.f32 %v898, %v994
    %v996 = vpop.f32.mrb[0].mxu0
    %997 = vmatprep.mubr.bf16.mxu0 %v382
    %998 = vmatmul.mubr.bf16.gmra.mrb[0].mxu0 %v381
    %v999 = vpop.f32.mrb[0].mxu0
    %v1000 = vadd.f32 %v903, %v999
    %v1001 = vpop.f32.mrb[0].mxu0
    %v1002 = vpop.f32.mrb[0].mxu0
    %v1003 = vadd.f32 %v906, %v1002
    %v1004 = vpop.f32.mrb[0].mxu0
    %1005 = vmatprep.mubr.bf16.mxu0 %v388
    %1006 = vmatmul.mubr.bf16.gmra.mrb[0].mxu0 %v387
    %v1007 = vpop.f32.mrb[0].mxu0
    %v1008 = vadd.f32 %v911, %v1007
    %v1009 = vpop.f32.mrb[0].mxu0
    %v1010 = vpop.f32.mrb[0].mxu0
    %v1011 = vadd.f32 %v914, %v1010
    %v1012 = vpop.f32.mrb[0].mxu0
    %1013 = vmatprep.mubr.bf16.mxu0 %v394
    %1014 = vmatmul.mubr.bf16.gmra.mrb[0].mxu0 %v393
    %v1015 = vpop.f32.mrb[0].mxu0
    %v1016 = vadd.f32 %v919, %v1015
    %v1017 = vpop.f32.mrb[0].mxu0
    %v1018 = vpop.f32.mrb[0].mxu0
    %v1019 = vadd.f32 %v922, %v1018
    %v1020 = vpop.f32.mrb[0].mxu0
    %1021 = vdwg.mxu0
    %v1022 = vmul.f32 %v960, %v960
    %v1023 = vmul.f32 %v963, %v963
    %v1024 = vmul.f32 %v968, %v968
    %v1025 = vmul.f32 %v971, %v971
    %v1026 = vmul.f32 %v976, %v976
    %v1027 = vmul.f32 %v979, %v979
    %v1028 = vmul.f32 %v984, %v984
    %v1029 = vmul.f32 %v987, %v987
    %v1030 = vmul.f32 %v992, %v992
    %v1031 = vmul.f32 %v995, %v995
    %v1032 = vmul.f32 %v1000, %v1000
    %v1033 = vmul.f32 %v1003, %v1003
    %v1034 = vmul.f32 %v1008, %v1008
    %v1035 = vmul.f32 %v1011, %v1011
    %v1036 = vmul.f32 %v1016, %v1016
    %v1037 = vmul.f32 %v1019, %v1019
    %1038 = vadd.xlane.f32.xlu0 %v1022
    %v1039 = vpop.xlane.xlu0 %1038
    %1040 = vadd.xlane.f32.xlu0 %v1023
    %v1041 = vpop.xlane.xlu0 %1040
    %1042 = vadd.xlane.f32.xlu0 %v1024
    %v1043 = vpop.xlane.xlu0 %1042
    %1044 = vadd.xlane.f32.xlu0 %v1025
    %v1045 = vpop.xlane.xlu0 %1044
    %1046 = vadd.xlane.f32.xlu0 %v1026
    %v1047 = vpop.xlane.xlu0 %1046
    %1048 = vadd.xlane.f32.xlu0 %v1027
    %v1049 = vpop.xlane.xlu0 %1048
    %1050 = vadd.xlane.f32.xlu0 %v1028
    %v1051 = vpop.xlane.xlu0 %1050
    %1052 = vadd.xlane.f32.xlu0 %v1029
    %v1053 = vpop.xlane.xlu0 %1052
    %1054 = vadd.xlane.f32.xlu0 %v1030
    %v1055 = vpop.xlane.xlu0 %1054
    %1056 = vadd.xlane.f32.xlu0 %v1031
    %v1057 = vpop.xlane.xlu0 %1056
    %1058 = vadd.xlane.f32.xlu0 %v1032
    %v1059 = vpop.xlane.xlu0 %1058
    %1060 = vadd.xlane.f32.xlu0 %v1033
    %v1061 = vpop.xlane.xlu0 %1060
    %1062 = vadd.xlane.f32.xlu0 %v1034
    %v1063 = vpop.xlane.xlu0 %1062
    %1064 = vadd.xlane.f32.xlu0 %v1035
    %v1065 = vpop.xlane.xlu0 %1064
    %1066 = vadd.xlane.f32.xlu0 %v1036
    %v1067 = vpop.xlane.xlu0 %1066
    %1068 = vadd.xlane.f32.xlu0 %v1037
    %v1069 = vpop.xlane.xlu0 %1068
    %v1070 = vmax.f32 %v1039, 1e-30
    %v1071 = vmax.f32 %v1041, 1e-30
    %v1072 = vmax.f32 %v1043, 1e-30
    %v1073 = vmax.f32 %v1045, 1e-30
    %v1074 = vmax.f32 %v1047, 1e-30
    %v1075 = vmax.f32 %v1049, 1e-30
    %v1076 = vmax.f32 %v1051, 1e-30
    %v1077 = vmax.f32 %v1053, 1e-30
    %v1078 = vmax.f32 %v1055, 1e-30
    %v1079 = vmax.f32 %v1057, 1e-30
    %v1080 = vmax.f32 %v1059, 1e-30
    %v1081 = vmax.f32 %v1061, 1e-30
    %v1082 = vmax.f32 %v1063, 1e-30
    %v1083 = vmax.f32 %v1065, 1e-30
    %v1084 = vmax.f32 %v1067, 1e-30
    %v1085 = vmax.f32 %v1069, 1e-30
    %v1086 = vrsqrt.pop %v1070
    %v1087 = vrsqrt.pop %v1071
    %v1088 = vrsqrt.pop %v1072
    %v1089 = vrsqrt.pop %v1073
    %v1090 = vrsqrt.pop %v1074
    %v1091 = vrsqrt.pop %v1075
    %v1092 = vrsqrt.pop %v1076
    %v1093 = vrsqrt.pop %v1077
    %v1094 = vrsqrt.pop %v1078
    %v1095 = vrsqrt.pop %v1079
    %v1096 = vrsqrt.pop %v1080
    %v1097 = vrsqrt.pop %v1081
    %v1098 = vrsqrt.pop %v1082
    %v1099 = vrsqrt.pop %v1083
    %v1100 = vrsqrt.pop %v1084
    %v1101 = vrsqrt.pop %v1085
    %v1102 = vmul.f32 %v960, %v1086
    %v1103 = vmul.f32 %v963, %v1087
    %v1104 = vmul.f32 %v968, %v1088
    %v1105 = vmul.f32 %v971, %v1089
    %v1106 = vmul.f32 %v976, %v1090
    %v1107 = vmul.f32 %v979, %v1091
    %v1108 = vmul.f32 %v984, %v1092
    %v1109 = vmul.f32 %v987, %v1093
    %v1110 = vmul.f32 %v992, %v1094
    %v1111 = vmul.f32 %v995, %v1095
    %v1112 = vmul.f32 %v1000, %v1096
    %v1113 = vmul.f32 %v1003, %v1097
    %v1114 = vmul.f32 %v1008, %v1098
    %v1115 = vmul.f32 %v1011, %v1099
    %v1116 = vmul.f32 %v1016, %v1100
    %v1117 = vmul.f32 %v1019, %v1101
    %v1118 = vld [vmem:[%s4] sm:$0xf]
    %v1119 = vld [vmem:[%s5] sm:$0xf]
    %v1120 = vld [vmem:[%s5 + $0x4] sm:$0xf]
    %v1121 = vld [vmem:[%s5 + $0x8] sm:$0xf]
    %v1122 = vld [vmem:[%s5 + $0xc] sm:$0xf]
    %v1123 = vld [vmem:[%s5 + $0x10] sm:$0xf]
    %v1124 = vld [vmem:[%s5 + $0x14] sm:$0xf]
    %v1125 = vld [vmem:[%s5 + $0x18] sm:$0xf]
    %v1126 = vld [vmem:[%s5 + $0x1c] sm:$0xf]
    %v1127 = vld [vmem:[#allocation5] sm:$0x1]
    %v1129 = vlaneseq
    %v1130 = vshrl.u32 %v1129, 7
    %v1131 = vsub.s32 0, %v1130
    %v1132 = vrot.slane %v1127, %v1131
    %v1142 = vunpack.c.l.b16 %v1119
    %v1143 = vunpack.c.l.b16 %v1120
    %v1144 = vunpack.c.l.b16 %v1121
    %v1145 = vunpack.c.l.b16 %v1122
    %v1146 = vunpack.c.l.b16 %v1123
    %v1147 = vunpack.c.l.b16 %v1124
    %v1148 = vunpack.c.l.b16 %v1125
    %v1149 = vunpack.c.l.b16 %v1126
    %v1150 = vpack.c.b16 %v1143, %v1142
    %v1151 = vpack.c.b16 %v1145, %v1144
    %v1152 = vpack.c.b16 %v1147, %v1146
    %v1153 = vpack.c.b16 %v1149, %v1148
    %vm1158 = vcmask 523264
    %v1160 = vsel %vm1158, %v1118, 0
    %1162 = vmatprep.subr.bf16.mxu0 0
    %1163 = vmatpush1.bf16.msra.mxu0 %v1150
    %1164 = vmatprep.subr.bf16.mxu0 0
    %1165 = vmatpush1.bf16.msra.mxu0 %v1151
    %1166 = vmatprep.subr.bf16.mxu0 0
    %1167 = vmatpush1.bf16.msra.mxu0 %v1152
    %1168 = vmatprep.subr.bf16.mxu0 0
    %1169 = vmatpush1.bf16.msra.mxu0 %v1153
    %1170 = vmatprep.subr.bf16.mxu0 0
    %1171 = vmatpush1.bf16.msra.mxu0 0
    %1172 = vmatprep.subr.bf16.mxu0 0
    %1173 = vmatpush1.bf16.msra.mxu0 0
    %1174 = vmatprep.subr.bf16.mxu0 0
    %1175 = vmatpush1.bf16.msra.mxu0 0
    %1176 = vmatprep.subr.bf16.mxu0 0
    %1177 = vmatpush1.bf16.msra.mxu0 0
    %1178 = vmatprep.subr.bf16.mxu0 0
    %1179 = vmatpush1.bf16.msra.mxu0 0
    %1180 = vmatprep.subr.bf16.mxu0 0
    %1181 = vmatpush1.bf16.msra.mxu0 0
    %1182 = vmatprep.subr.bf16.mxu0 0
    %1183 = vmatpush1.bf16.msra.mxu0 0
    %1184 = vmatprep.subr.bf16.mxu0 0
    %1185 = vmatpush1.bf16.msra.mxu0 0
    %1186 = vmatprep.subr.bf16.mxu0 0
    %1187 = vmatpush1.bf16.msra.mxu0 0
    %1188 = vmatprep.subr.bf16.mxu0 0
    %1189 = vmatpush1.bf16.msra.mxu0 0
    %1190 = vmatprep.subr.bf16.mxu0 0
    %1191 = vmatpush1.bf16.msra.mxu0 0
    %1192 = vmatprep.subr.bf16.mxu0 0
    %1193 = vmatpush1.bf16.msra.mxu0 0
    %1194 = vmatprep.mubr.bf16.mxu0 0
    %1195 = vmatmul.mubr.bf16.gmra.mrb[0].mxu0 %v1160
    %v1196 = vpop.f32.mrb[0].mxu0
    %v1197 = vadd.f32 %v1132, %v1196
    %v1198 = vpop.f32.mrb[0].mxu0
    %v1199 = vpop.f32.mrb[0].mxu0
    %v1200 = vpop.f32.mrb[0].mxu0
    %1201 = vdwg.mxu0
    %v1202 = vmul.f32 %v1197, %v1197
    %1203 = vadd.xlane.f32.xlu0 %v1202
    %v1204 = vpop.xlane.xlu0 %1203
    %v1205 = vmax.f32 %v1204, 1e-30
    %v1206 = vrsqrt.pop %v1205
    %v1207 = vmul.f32 %v1197, %v1206
    %s1208 = sld [smem:[#allocation2]]
    %1209 = vmatprep.subr.mxu0 0.0
    %1210 = vmatpush1.xpose.msra.mxu0 %v1102
    %1211 = vmatprep.subr.mxu0 0.0
    %1212 = vmatpush1.xpose.msra.mxu0 %v1103
    %1213 = vmatprep.subr.mxu0 0.0
    %1214 = vmatpush1.xpose.msra.mxu0 %v1104
    %1215 = vmatprep.subr.mxu0 0.0
    %1216 = vmatpush1.xpose.msra.mxu0 %v1105
    %1217 = vmatprep.subr.mxu0 0.0
    %1218 = vmatpush1.xpose.msra.mxu0 %v1106
    %1219 = vmatprep.subr.mxu0 0.0
    %1220 = vmatpush1.xpose.msra.mxu0 %v1107
    %1221 = vmatprep.subr.mxu0 0.0
    %1222 = vmatpush1.xpose.msra.mxu0 %v1108
    %1223 = vmatprep.subr.mxu0 0.0
    %1224 = vmatpush1.xpose.msra.mxu0 %v1109
    %1225 = vmatprep.subr.mxu0 0.0
    %1226 = vmatpush1.xpose.msra.mxu0 %v1110
    %1227 = vmatprep.subr.mxu0 0.0
    %1228 = vmatpush1.xpose.msra.mxu0 %v1111
    %1229 = vmatprep.subr.mxu0 0.0
    %1230 = vmatpush1.xpose.msra.mxu0 %v1112
    %1231 = vmatprep.subr.mxu0 0.0
    %1232 = vmatpush1.xpose.msra.mxu0 %v1113
    %1233 = vmatprep.subr.mxu0 0.0
    %1234 = vmatpush1.xpose.msra.mxu0 %v1114
    %1235 = vmatprep.subr.mxu0 0.0
    %1236 = vmatpush1.xpose.msra.mxu0 %v1115
    %1237 = vmatprep.subr.mxu0 0.0
    %1238 = vmatpush1.xpose.msra.mxu0 %v1116
    %1239 = vmatprep.subr.mxu0 0.0
    %1240 = vmatpush1.xpose.msra.mxu0 %v1117
    %1241 = vmatprep.subr.mxu0 0.0
    %1242 = vmatpush1.xpose.msra.mxu0 0.0
    %1243 = vmatprep.subr.mxu0 0.0
    %1244 = vmatpush1.xpose.msra.mxu0 0.0
    %1245 = vmatprep.subr.mxu0 0.0
    %1246 = vmatpush1.xpose.msra.mxu0 0.0
    %1247 = vmatprep.subr.mxu0 0.0
    %1248 = vmatpush1.xpose.msra.mxu0 0.0
    %1249 = vmatprep.subr.mxu0 0.0
    %1250 = vmatpush1.xpose.msra.mxu0 0.0
    %1251 = vmatprep.subr.mxu0 0.0
    %1252 = vmatpush1.xpose.msra.mxu0 0.0
    %1253 = vmatprep.subr.mxu0 0.0
    %1254 = vmatpush1.xpose.msra.mxu0 0.0
    %1255 = vmatprep.subr.mxu0 0.0
    %1256 = vmatpush1.xpose.msra.mxu0 0.0
    %1257 = vmatprep.subr.mxu0 0.0
    %1258 = vmatpush1.xpose.msra.mxu0 0.0
    %1259 = vmatprep.subr.mxu0 0.0
    %1260 = vmatpush1.xpose.msra.mxu0 0.0
    %1261 = vmatprep.subr.mxu0 0.0
    %1262 = vmatpush1.xpose.msra.mxu0 0.0
    %1263 = vmatprep.subr.mxu0 0.0
    %1264 = vmatpush1.xpose.msra.mxu0 0.0
    %1265 = vmatprep.subr.mxu0 0.0
    %1266 = vmatpush1.xpose.msra.mxu0 0.0
    %1267 = vmatprep.subr.mxu0 0.0
    %1268 = vmatpush1.xpose.msra.mxu0 0.0
    %1269 = vmatprep.subr.mxu0 0.0
    %1270 = vmatpush1.xpose.msra.mxu0 0.0
    %1271 = vmatprep.subr.mxu0 0.0
    %1272 = vmatpush1.xpose.msra.mxu0 0.0
    %1273 = vmatprep.mubr.f32.mxu0 0.0
    %1274 = vmatmul.mubr.f32.gmra.mrb[0].mxu0 %v1207
    %v1275 = vpop.f32.mrb[0].mxu0
    %v1276 = vadd.f32 0.0, %v1275
    %v1277 = vpop.f32.mrb[0].mxu0
    %1278 = vdwg.mxu0
    %v1279 = vstv %s1208
    %v1280 = vmul.f32 %v1279, %v1276
    %1281 = vst [vmem:[%s7] sm:$0xff] %v1280
    // Predicated region
    $region38: #{clip_forward.1} parent=1 // pred_check
      _
    $region39: #{clip_forward.1} parent=1 // pred_check_branch
      %1283 = sbr.rel (0) target = $region41
    $region40: #{clip_forward.1} parent=1 // pred_region
      _
    $region41: #{clip_forward.1} parent=1 // pred_fallthru
      _
    // Predicated region
    $region42: #{clip_forward.1} parent=1 // pred_check
      _
    $region43: #{clip_forward.1} parent=1 // pred_check_branch
      %1285 = sbr.rel (0) target = $region45
    $region44: #{clip_forward.1} parent=1 // pred_region
      _
    $region45: #{clip_forward.1} parent=1 // pred_fallthru
      _
    %1286 = vsyncpa [#allocation4], 1
    %1287 = vsyncpa [#allocation6], 1

</llo_original>
